<compile_context>
chip_gen: v5e
topology: v5e:2x2
jax: 0.10.0
libtpu: 0.0.40
codegen_flags: <defaults>
</compile_context>

<pallas_src>
import functools

import jax
import jax.numpy as jnp
from jax.experimental import pallas as pl
from jax.experimental.pallas import tpu as pltpu


def _layernorm_kernel(x_ref, scale_ref, offset_ref, o_ref, *, eps, inv_n, inv_nm1):
    x = x_ref[...].astype(jnp.float32)                    # (tile, d_hid)

    # Single pass over x: two independent cross-lane reductions (interleave on XLU).
    s1 = jnp.sum(x, axis=-1, keepdims=True)               # (tile, 1)
    s2 = jnp.sum(x * x, axis=-1, keepdims=True)           # (tile, 1)

    mean = s1 * inv_n                                      # (tile, 1)
    var = (s2 - s1 * mean) * inv_nm1                       # == (s2 - N*mean^2)/(N-1)
    var = jnp.maximum(var, 0.0)                            # guard fp32 cancellation
    std = jnp.sqrt(var)

    # Per-row reciprocal instead of per-element divide.  approx=False keeps full
    # precision; approx=True would move this to the EUP slot (~1e-3 rel err OK).
    inv = pl.reciprocal(std + eps, approx=False)           # (tile, 1)

    scale = scale_ref[...].astype(jnp.float32)             # (1, d_hid)
    offset = offset_ref[...].astype(jnp.float32)           # (1, d_hid)

    o_ref[...] = ((x - mean) * inv * scale + offset).astype(o_ref.dtype)


def _cdiv(a, b):
    return -(-a // b)


def _round_up(x, m):
    return ((x + m - 1) // m) * m


def _pick_row_tile(rows, d_hid, itemsize):
    # Sublane packing: 8 rows for 32-bit, 16 for 16-bit, 32 for 8-bit dtypes.
    pack = 8 * max(1, 4 // itemsize)
    # ~2 MiB per pipeline buffer: measured HBM roofline saturates well before this,
    # and it keeps (4 buffers + fp32 temps) far under VMEM on every generation.
    per_buf_cap = 2 * 1024 * 1024
    row_bytes = max(d_hid * itemsize, 1)
    tile_buf = max(pack, (per_buf_cap // row_bytes) // pack * pack)
    # Keep >= ~8 grid steps so both v7x TensorCores get work (parallel axis) and
    # the in/out double buffers actually pipeline (also helps 1-TC chips).
    tile_grid = _round_up(_cdiv(rows, 8), pack)
    tile = min(tile_buf, tile_grid)
    if tile > rows:
        tile = rows        # single full-extent block (block dim == array dim is legal)
    return tile


def layer_normalization(x, scale, offset, *, eps=1.0):
    """x: (..., d_hid); scale, offset: (d_hid,). Returns same shape/dtype as x."""
    assert x.ndim >= 2
    d_hid = x.shape[-1]
    orig_shape = x.shape

    x2 = x.reshape(-1, d_hid)                              # (rows, d_hid), free reshape
    rows = x2.shape[0]
    itemsize = jnp.dtype(x.dtype).itemsize

    tile = _pick_row_tile(rows, d_hid, itemsize)
    grid = _cdiv(rows, tile)                               # ragged last block is masked

    scale2 = scale.reshape(1, d_hid)
    offset2 = offset.reshape(1, d_hid)

    # VMEM budget: 2 in + 2 out pipeline buffers of (tile, d_hid) in the I/O dtype,
    # plus ~3 fp32 temporaries of the same tile (x upcast / intermediates), plus slack.
    buf_bytes = tile * d_hid * itemsize
    f32_tmp_bytes = 3 * tile * d_hid * 4
    vmem_limit = 4 * buf_bytes + f32_tmp_bytes + (4 << 20)
    vmem_limit = max(16 << 20, min(vmem_limit, 48 << 20))  # never request full v7x VMEM

    # torch.std(ddof=1) of a single element is NaN; mimic that instead of crashing.
    inv_nm1 = float("nan") if d_hid < 2 else 1.0 / (d_hid - 1)

    kernel = functools.partial(
        _layernorm_kernel, eps=float(eps), inv_n=1.0 / d_hid, inv_nm1=inv_nm1
    )

    out = pl.pallas_call(
        kernel,
        out_shape=jax.ShapeDtypeStruct((rows, d_hid), x.dtype),
        grid_spec=pltpu.PrefetchScalarGridSpec(
            num_scalar_prefetch=0,
            grid=(grid,),
            in_specs=[
                pl.BlockSpec((tile, d_hid), lambda i: (i, 0)),
                pl.BlockSpec((1, d_hid), lambda i: (0, 0)),
                pl.BlockSpec((1, d_hid), lambda i: (0, 0)),
            ],
            out_specs=pl.BlockSpec((tile, d_hid), lambda i: (i, 0)),
        ),
        compiler_params=pltpu.CompilerParams(
            dimension_semantics=("parallel",),
            vmem_limit_bytes=int(vmem_limit),
        ),
    )(x2, scale2, offset2)

    return out.reshape(orig_shape)


def _reference(x, scale, offset, eps=1.0):
    xf = x.astype(jnp.float32)
    mean = jnp.mean(xf, axis=-1, keepdims=True)
    std = jnp.std(xf, axis=-1, keepdims=True, ddof=1)
    return (scale * (xf - mean) / (std + eps) + offset).astype(x.dtype)


if __name__ == "__main__":
    key = jax.random.PRNGKey(0)
    k1, k2 = jax.random.split(key)

    # Main example: lane-dense hidden size (multiple of 128), small shapes.
    batch, seq, d_hid = 2, 8, 128
    x = jax.random.normal(k1, (batch, seq, d_hid), dtype=jnp.float32)
    scale = jnp.ones((d_hid,), dtype=jnp.float32)       # matches nn.Module init
    offset = jnp.zeros((d_hid,), dtype=jnp.float32)

    out = jax.block_until_ready(layer_normalization(x, scale, offset, eps=1.0))
    ref = _reference(x, scale, offset, eps=1.0)
    assert out.shape == x.shape and out.dtype == x.dtype
    assert jnp.allclose(out, ref, atol=2e-5, rtol=1e-5), "mismatch vs reference (dense)"

    # Ragged rows (21 % 8 != 0) and lane-sparse d_hid: exercises the write-masked
    # final block now that the wrapper pad/slice has been removed.
    xb = jax.random.normal(k2, (3, 7, 32), dtype=jnp.float32) * 2.0 + 0.5
    sb = jax.random.normal(jax.random.PRNGKey(1), (32,), dtype=jnp.float32)
    ob = jax.random.normal(jax.random.PRNGKey(2), (32,), dtype=jnp.float32)
    outb = jax.block_until_ready(layer_normalization(xb, sb, ob, eps=1.0))
    refb = _reference(xb, sb, ob, eps=1.0)
    assert outb.shape == xb.shape and outb.dtype == xb.dtype
    assert jnp.allclose(outb, refb, atol=2e-5, rtol=1e-5), "mismatch vs reference (ragged)"

    print("KERNEL_OK")
</pallas_src>

<mosaic_0001>
module attributes {stable_mosaic.version = 11 : i64} {
  func.func @_layernorm_kernel(%arg0: i32, %arg1: memref<8x128xf32, #tpu.memory_space<vmem>>, %arg2: memref<1x128xf32, #tpu.memory_space<vmem>>, %arg3: memref<1x128xf32, #tpu.memory_space<vmem>>, %arg4: memref<8x128xf32, #tpu.memory_space<vmem>>) attributes {dimension_semantics = [#tpu.dimension_semantics<parallel>], iteration_bounds = array<i64: 2>, scalar_prefetch = 0 : i64, scratch_operands = 0 : i64, tpu.core_type = #tpu.core_type<tc>, window_params = [{transform_indices = @transform_0, window_bounds = array<i64: 8, 128>}, {pipeline_mode = #tpu.pipeline_mode<synchronous>, transform_indices = @transform_1, window_bounds = array<i64: 1, 128>}, {pipeline_mode = #tpu.pipeline_mode<synchronous>, transform_indices = @transform_2, window_bounds = array<i64: 1, 128>}, {transform_indices = @transform_3, window_bounds = array<i64: 8, 128>}]} {
    %c0 = arith.constant 0 : index
    %c0_0 = arith.constant 0 : index
    %0 = vector.load %arg1[%c0, %c0_0] : memref<8x128xf32, #tpu.memory_space<vmem>>, vector<8x128xf32>
    %cst = arith.constant dense<0.000000e+00> : vector<8xf32>
    %1 = vector.multi_reduction <add>, %0, %cst [1] : vector<8x128xf32> to vector<8xf32>
    %2 = vector.shape_cast %1 : vector<8xf32> to vector<8x1xf32>
    %3 = arith.mulf %0, %0 : vector<8x128xf32>
    %cst_1 = arith.constant dense<0.000000e+00> : vector<8xf32>
    %4 = vector.multi_reduction <add>, %3, %cst_1 [1] : vector<8x128xf32> to vector<8xf32>
    %5 = vector.shape_cast %4 : vector<8xf32> to vector<8x1xf32>
    %cst_2 = arith.constant 7.812500e-03 : f32
    %6 = vector.broadcast %cst_2 : f32 to vector<8x1xf32>
    %7 = arith.mulf %2, %6 : vector<8x1xf32>
    %8 = arith.mulf %2, %7 : vector<8x1xf32>
    %9 = arith.subf %5, %8 : vector<8x1xf32>
    %cst_3 = arith.constant 0.00787401571 : f32
    %10 = vector.broadcast %cst_3 : f32 to vector<8x1xf32>
    %11 = arith.mulf %9, %10 : vector<8x1xf32>
    %cst_4 = arith.constant 0.000000e+00 : f32
    %12 = vector.broadcast %cst_4 : f32 to vector<8x1xf32>
    %13 = arith.maximumf %11, %12 : vector<8x1xf32>
    %14 = math.sqrt %13 : vector<8x1xf32>
    %cst_5 = arith.constant 1.000000e+00 : f32
    %15 = vector.broadcast %cst_5 : f32 to vector<8x1xf32>
    %16 = arith.addf %14, %15 : vector<8x1xf32>
    %17 = tpu.reciprocal %16 : vector<8x1xf32> -> vector<8x1xf32>
    %c0_6 = arith.constant 0 : index
    %c0_7 = arith.constant 0 : index
    %18 = vector.load %arg2[%c0_6, %c0_7] : memref<1x128xf32, #tpu.memory_space<vmem>>, vector<1x128xf32>
    %c0_8 = arith.constant 0 : index
    %c0_9 = arith.constant 0 : index
    %19 = vector.load %arg3[%c0_8, %c0_9] : memref<1x128xf32, #tpu.memory_space<vmem>>, vector<1x128xf32>
    %20 = vector.broadcast %7 : vector<8x1xf32> to vector<8x128xf32>
    %21 = arith.subf %0, %20 : vector<8x128xf32>
    %22 = vector.broadcast %17 : vector<8x1xf32> to vector<8x128xf32>
    %23 = arith.mulf %21, %22 : vector<8x128xf32>
    %24 = vector.broadcast %18 : vector<1x128xf32> to vector<8x128xf32>
    %25 = arith.mulf %23, %24 : vector<8x128xf32>
    %26 = vector.broadcast %19 : vector<1x128xf32> to vector<8x128xf32>
    %27 = arith.addf %25, %26 : vector<8x128xf32>
    %c0_10 = arith.constant 0 : index
    %c0_11 = arith.constant 0 : index
    %28 = vector.load %arg4[%c0_10, %c0_11] : memref<8x128xf32, #tpu.memory_space<vmem>>, vector<8x128xf32>
    tpu.vector_store %arg4[%c0_10, %c0_11], %27 {strides = array<i32>} : memref<8x128xf32, #tpu.memory_space<vmem>>, vector<8x128xf32>,
    return
  }
  func.func @transform_0(%arg0: i32) -> (i32, i32) {
    %c0_i32 = arith.constant 0 : i32
    %c0_i32_0 = arith.constant 0 : i32
    return %arg0, %c0_i32 : i32, i32
  }
  func.func @transform_1(%arg0: i32) -> (i32, i32) {
    %c0_i32 = arith.constant 0 : i32
    %c0_i32_0 = arith.constant 0 : i32
    %c0_i32_1 = arith.constant 0 : i32
    return %c0_i32, %c0_i32_0 : i32, i32
  }
  func.func @transform_2(%arg0: i32) -> (i32, i32) {
    %c0_i32 = arith.constant 0 : i32
    %c0_i32_0 = arith.constant 0 : i32
    %c0_i32_1 = arith.constant 0 : i32
    return %c0_i32, %c0_i32_0 : i32, i32
  }
  func.func @transform_3(%arg0: i32) -> (i32, i32) {
    %c0_i32 = arith.constant 0 : i32
    %c0_i32_0 = arith.constant 0 : i32
    return %arg0, %c0_i32 : i32, i32
  }
}

</mosaic_0001>

<llo_original>
// kernel: tpu_custom_call.1
$region0: #{tpu_custom_call.1}
  #allocation0 [shape = 'u32[]', space=smem, size = 0x4, offset = 0x4, fixed_abs, tag = 'smem constant byte address 0x4 - core index']
  #allocation1 [shape = 'u32[72,128]{1,0:T(1,128)}', space=vmem, size = 0x9000, scoped, tag = 'internal scratch']
  %s0 = inlined_call_operand.hbm [shape: f32[16,128], index: 0, kind: input, shape index: {}]
  %s1 = inlined_call_operand.hbm [shape: f32[1,128], index: 1, kind: input, shape index: {}]
  %s2 = inlined_call_operand.vmem [shape: f32[1,128], index: 2, kind: input, shape index: {}]
  %s3 = inlined_call_operand.hbm [shape: f32[16,128], index: 3, kind: output, shape index: {}]
  %s4 = sld [smem:[#allocation0]]
  $region53: #{tpu_custom_call.1} parent=0
    _
  %s6 = ssub.s32 1, %s4
  %s7 = scalar_select 0, %s6, %s4
  $region1: #{tpu_custom_call.1} parent=0
    #allocation2 [shape = 'u8[8192]{0}', space=vmem, size = 0x2000, scoped, tag = 'input window, operand 0']
    #allocation3 [shape = 's32[2]{0}', space=sflag, size = 0x8, scoped, tag = 'scoped memory for tpu_custom_call.1']
    #allocation4 [shape = 's32[2]{0}', space=sflag, size = 0x8, scoped, tag = 'scoped memory for tpu_custom_call.1']
    #allocation5 [shape = 'u8[512]{0}', space=vmem, size = 0x400, scoped, tag = 'input window, operand 1, single buffered']
    #allocation6 [shape = 's32[1]{0}', space=sflag, size = 0x4, scoped, tag = 'scoped memory for tpu_custom_call.1']
    #allocation7 [shape = 'u8[8192]{0}', space=vmem, size = 0x2000, scoped, tag = 'output window, operand 0']
    %8 = vsyncpa [#allocation3], 0
    %s9 = scalar_lea.sflag [#allocation3], 1
    %10 = vsyncpa %s9, 0
    %11 = vsyncpa [#allocation6], 0
    %12 = vsyncpa [#allocation4], 0
    %s13 = scalar_lea.sflag [#allocation4], 1
    %14 = vsyncpa %s13, 0
    loop: start=0, step=1, limit=4
    $region2: #{tpu_custom_call.1} parent=1 // loop_pre_header
      _
    $region3: #{tpu_custom_call.1} parent=1 // loop_header
      %s16 = sphi 0, %s20
      %p17 = scmp.ge.s32.totalorder %s16, 4
      %s26 = sphi 0, %s28
      %s29 = sphi 0, %s26
      %s30 = sphi 0, %s29
      %s46 = sphi 0, %s30
      %s50 = sphi 0, %s50
      %s52 = sphi 0, %s50
      %s53 = sphi 0, %s52
      %s67 = sphi 0, %s53
      %s71 = sphi 0, %s71
      %s73 = sphi 0, %s71
      %s74 = sphi 0, %s73
      %s88 = sphi 0, %s74
      %s94 = sphi 0, %s96
      %s97 = sphi 0, %s94
      %s98 = sphi 0, %s97
      %s114 = sphi 0, %s98
    $region4: #{tpu_custom_call.1} parent=1 // loop_header_branch
      %19 = sbr.rel (%p17) target = $region8
    $region5: #{tpu_custom_call.1} parent=1 // loop_body
      %s21 = ssub.s32 %s16, 1
      %s22 = ssub.s32 %s16, 2
      %s23 = sadd.s32 %s16, 1
      %s24 = ssub.s32 %s16, %s23
      %p25 = scmp.eq.s32.totalorder %s24, 0
      %s27 = sadd.s32 %s26, 1
      %s28 = scalar_select %p25, %s26, %s27
      %p31 = pneg %p25
      %p32 = scmp.eq.s32.totalorder %s16, 1
      %p33 = por %p31, %p32
      %p34 = scmp.ne.s32.totalorder %s26, %s29
      %p35 = scmp.eq.s32.totalorder %s16, 0
      %p36 = por %p34, %p35
      %p37 = scmp.ne.s32.totalorder %s26, %s29
      %p38 = scmp.eq.s32.totalorder %s21, 1
      %p39 = por %p37, %p38
      %p40 = scmp.ne.s32.totalorder %s29, %s30
      %p41 = scmp.eq.s32.totalorder %s21, 0
      %p42 = por %p40, %p41
      %p43 = scmp.ne.s32.totalorder %s29, %s30
      %p44 = scmp.eq.s32.totalorder %s22, 1
      %p45 = por %p43, %p44
      %p47 = scmp.ne.s32.totalorder %s30, %s46
      %p48 = scmp.eq.s32.totalorder %s22, 0
      %p49 = por %p47, %p48
      %s51 = sadd.s32 %s50, 1
      %p54 = scmp.eq.s32.totalorder %s16, 1
      %p55 = scmp.ne.s32.totalorder %s50, %s52
      %p56 = scmp.eq.s32.totalorder %s16, 0
      %p57 = por %p55, %p56
      %p58 = scmp.ne.s32.totalorder %s50, %s52
      %p59 = scmp.eq.s32.totalorder %s21, 1
      %p60 = por %p58, %p59
      %p61 = scmp.ne.s32.totalorder %s52, %s53
      %p62 = scmp.eq.s32.totalorder %s21, 0
      %p63 = por %p61, %p62
      %p64 = scmp.ne.s32.totalorder %s52, %s53
      %p65 = scmp.eq.s32.totalorder %s22, 1
      %p66 = por %p64, %p65
      %p68 = scmp.ne.s32.totalorder %s53, %s67
      %p69 = scmp.eq.s32.totalorder %s22, 0
      %p70 = por %p68, %p69
      %s72 = sadd.s32 %s71, 1
      %p75 = scmp.eq.s32.totalorder %s16, 1
      %p76 = scmp.ne.s32.totalorder %s71, %s73
      %p77 = scmp.eq.s32.totalorder %s16, 0
      %p78 = por %p76, %p77
      %p79 = scmp.ne.s32.totalorder %s71, %s73
      %p80 = scmp.eq.s32.totalorder %s21, 1
      %p81 = por %p79, %p80
      %p82 = scmp.ne.s32.totalorder %s73, %s74
      %p83 = scmp.eq.s32.totalorder %s21, 0
      %p84 = por %p82, %p83
      %p85 = scmp.ne.s32.totalorder %s73, %s74
      %p86 = scmp.eq.s32.totalorder %s22, 1
      %p87 = por %p85, %p86
      %p89 = scmp.ne.s32.totalorder %s74, %s88
      %p90 = scmp.eq.s32.totalorder %s22, 0
      %p91 = por %p89, %p90
      %s92 = ssub.s32 %s16, %s23
      %p93 = scmp.eq.s32.totalorder %s92, 0
      %s95 = sadd.s32 %s94, 1
      %s96 = scalar_select %p93, %s94, %s95
      %p99 = pneg %p93
      %p100 = scmp.eq.s32.totalorder %s16, 1
      %p101 = por %p99, %p100
      %p102 = scmp.ne.s32.totalorder %s94, %s97
      %p103 = scmp.eq.s32.totalorder %s16, 0
      %p104 = por %p102, %p103
      %p105 = scmp.ne.s32.totalorder %s94, %s97
      %p106 = scmp.eq.s32.totalorder %s21, 1
      %p107 = por %p105, %p106
      %p108 = scmp.ne.s32.totalorder %s97, %s98
      %p109 = scmp.eq.s32.totalorder %s21, 0
      %p110 = por %p108, %p109
      %p111 = scmp.ne.s32.totalorder %s97, %s98
      %p112 = scmp.eq.s32.totalorder %s22, 1
      %p113 = por %p111, %p112
      %p115 = scmp.ne.s32.totalorder %s98, %s114
      %p116 = scmp.eq.s32.totalorder %s22, 0
      %p117 = por %p115, %p116
      %p118 = scmp.le.s32.totalorder 1, %s16
      %p119 = scmp.lt.s32.totalorder %s16, 3
      %p120 = pnand %p118, %p119
      %p121 = pneg %p120
      // Predicated region
      $region9: #{tpu_custom_call.1} parent=5 // pred_check
        _
      $region10: #{tpu_custom_call.1} parent=5 // pred_check_branch
        %123 = sbr.rel (%p120) target = $region12
      $region11: #{tpu_custom_call.1} parent=5 // pred_region
        %s124 = ssub.s32 %s16, 1
        // Predicated region
        $region13: #{tpu_custom_call.1} parent=11 // pred_check
          %p125 = pneg %p63
        $region14: #{tpu_custom_call.1} parent=11 // pred_check_branch
          %127 = sbr.rel (%p125) target = $region16
        $region15: #{tpu_custom_call.1} parent=11 // pred_region
          %129 = vsyncadd [#allocation6], 0
          %s131 = sshll.u32 %s1, 4
          %s132 = int_to_ptr.hbm [resolvable:$true] %s131
          %s133 = sshll.u32 [#allocation5], 4
          %s134 = int_to_ptr.vmem [resolvable:$true] %s133
          %136 = dma.hbm_to_vmem [thread:$0]  %s132, 16, %s134, [#allocation6]
        $region16: #{tpu_custom_call.1} parent=11 // pred_fallthru
          _
        // Predicated region
        $region17: #{tpu_custom_call.1} parent=11 // pred_check
          %p137 = pneg %p84
        $region18: #{tpu_custom_call.1} parent=11 // pred_check_branch
          %139 = sbr.rel (%p137) target = $region20
        $region19: #{tpu_custom_call.1} parent=11 // pred_region
          _
        $region20: #{tpu_custom_call.1} parent=11 // pred_fallthru
          _
      $region12: #{tpu_custom_call.1} parent=5 // pred_fallthru
        _
      %p140 = scmp.lt.s32.totalorder %s16, 2
      // Predicated region
      $region21: #{tpu_custom_call.1} parent=5 // pred_check
        %p141 = pneg %p140
      $region22: #{tpu_custom_call.1} parent=5 // pred_check_branch
        %143 = sbr.rel (%p141) target = $region24
      $region23: #{tpu_custom_call.1} parent=5 // pred_region
        // Predicated region
        $region25: #{tpu_custom_call.1} parent=23 // pred_check
          %p144 = pneg %p36
        $region26: #{tpu_custom_call.1} parent=23 // pred_check_branch
          %146 = sbr.rel (%p144) target = $region28
        $region27: #{tpu_custom_call.1} parent=23 // pred_region
          %s147 = sand.u32 %s26, 1
          %s148 = scalar_lea.sflag [#allocation3], %s147
          %s149 = sand.u32 %s26, 1
          %s150 = smul.addr %s149, 8
          %s151 = scalar_lea.vmem [#allocation2], %s150
          %153 = vsyncadd %s148, 0
          %s154 = smul.addr %s16, 8
          %s155 = scalar_lea.hbm %s0, %s154
          %s157 = sshll.u32 %s155, 4
          %s158 = int_to_ptr.hbm [resolvable:$true] %s157
          %s159 = sshll.u32 %s151, 4
          %s160 = int_to_ptr.vmem [resolvable:$true] %s159
          %162 = dma.hbm_to_vmem [thread:$0]  %s158, 128, %s160, %s148
        $region28: #{tpu_custom_call.1} parent=23 // pred_fallthru
          _
      $region24: #{tpu_custom_call.1} parent=5 // pred_fallthru
        _
      %p163 = scmp.le.s32.totalorder 1, %s16
      %p164 = scmp.lt.s32.totalorder %s16, 3
      %p165 = pnand %p163, %p164
      %p166 = pneg %p165
      // Predicated region
      $region29: #{tpu_custom_call.1} parent=5 // pred_check
        _
      $region30: #{tpu_custom_call.1} parent=5 // pred_check_branch
        %168 = sbr.rel (%p165) target = $region32
      $region31: #{tpu_custom_call.1} parent=5 // pred_region
        %s169 = ssub.s32 %s16, 1
        %s170 = sand.u32 %s29, 1
        %s171 = scalar_lea.sflag [#allocation3], %s170
        %s172 = sand.u32 %s29, 1
        %s173 = smul.addr %s172, 8
        %s174 = scalar_lea.vmem [#allocation2], %s173
        // Predicated region
        $region33: #{tpu_custom_call.1} parent=31 // pred_check
          %p175 = pneg %p42
        $region34: #{tpu_custom_call.1} parent=31 // pred_check_branch
          %177 = sbr.rel (%p175) target = $region36
        $region35: #{tpu_custom_call.1} parent=31 // pred_region
          %179 = dma.done %s171, 128
        $region36: #{tpu_custom_call.1} parent=31 // pred_fallthru
          _
        // Predicated region
        $region37: #{tpu_custom_call.1} parent=31 // pred_check
          %p180 = pneg %p63
        $region38: #{tpu_custom_call.1} parent=31 // pred_check_branch
          %182 = sbr.rel (%p180) target = $region40
        $region39: #{tpu_custom_call.1} parent=31 // pred_region
          %184 = dma.done [#allocation6], 16
        $region40: #{tpu_custom_call.1} parent=31 // pred_fallthru
          _
        %s185 = sand.u32 %s29, 1
        %s186 = scalar_lea.sflag [#allocation3], %s185
        %s187 = sand.u32 %s29, 1
        %s188 = smul.addr %s187, 8
        %s189 = scalar_lea.vmem [#allocation2], %s188
        %p190 = pneg %p42
        %p191 = pneg %p39
        %p192 = pneg %p63
        %p193 = pneg %p60
        %p194 = pneg %p84
        %p195 = pneg %p81
        %p196 = pneg %p110
        %p197 = pneg %p107
        %s198 = sand.u32 %s97, 1
        %s199 = scalar_lea.sflag [#allocation4], %s198
        %s200 = sand.u32 %s97, 1
        %s201 = smul.addr %s200, 8
        %s202 = scalar_lea.vmem [#allocation7], %s201
        %v203 = vld [vmem:[%s174] sm:$0xff]
        %204 = vadd.xlane.f32.xlu0 %v203
        %v205 = vpop.xlane.xlu0 %204
        %v206 = vmul.f32 %v203, %v203
        %207 = vadd.xlane.f32.xlu0 %v206
        %v208 = vpop.xlane.xlu0 %207
        %v209 = vmul.f32 %v205, 0.0078125
        %v210 = vmul.f32 %v205, %v209
        %v211 = vsub.f32 %v208, %v210
        %v212 = vmul.f32 %v211, 0.007874016
        %v213 = vmax.f32 %v212, 0.0
        %v214 = vrsqrt.pop %v213
        %v215 = vmul.f32 %v214, %v213
        %v216 = vmul.f32 %v215, %v214
        %v217 = vmul.f32 0.5, %v216
        %v218 = vsub.f32 1.5, %v217
        %v219 = vmul.f32 %v214, %v218
        %v220 = vmul.f32 %v213, %v219
        %vm221 = vcmp.eq.f32.partialorder %v213, inf
        %v222 = vsel %vm221, %v213, %v220
        %vm223 = vcmp.eq.f32.partialorder %v213, 0.0
        %v224 = vand.u32 %v213, 2147483648
        %v225 = vsel %vm223, %v224, %v222
        %v226 = vadd.f32 %v225, 1.0
        %v227 = vrcp.pop %v226
        %v228 = vmul.f32 %v226, %v227
        %v229 = vsub.f32 1.0, %v228
        %v230 = vmul.f32 %v227, %v229
        %v231 = vadd.f32 %v227, %v230
        %vm232 = vweird.f32 %v226
        %vm233 = vweird.f32 %v227
        %vm234 = vmor %vm232, %vm233
        %v235 = vsel %vm234, %v227, %v231
        %v236 = vand.u32 2147483647, %v226
        %vm237 = vcmp.eq.f32.partialorder %v236, 8.507059e+37
        %v238 = vand.u32 %v226, 2147483648
        %v239 = vor.u32 1.1754944e-38, %v238
        %v240 = vsel %vm237, %v239, %v235
        %v241 = vld [vmem:[#allocation5] sm:$0x1]
        %v242 = vld [vmem:[%s2] sm:$0x1]
        %v243 = vsub.f32 %v203, %v209
        %v244 = vmul.f32 %v243, %v240
        %v246 = vperm.slane %v241, 0
        %v248 = vmul.f32 %v244, %v246
        %v250 = vperm.slane %v242, 0
        %v252 = vadd.f32 %v248, %v250
        %253 = vst [vmem:[%s202] sm:$0xff] %v252
        %s254 = sand.u32 %s97, 1
        %s255 = scalar_lea.sflag [#allocation4], %s254
        %s256 = sand.u32 %s97, 1
        %s257 = smul.addr %s256, 8
        %s258 = scalar_lea.vmem [#allocation7], %s257
        // Predicated region
        $region41: #{tpu_custom_call.1} parent=31 // pred_check
          %p259 = pneg %p107
        $region42: #{tpu_custom_call.1} parent=31 // pred_check_branch
          %261 = sbr.rel (%p259) target = $region44
        $region43: #{tpu_custom_call.1} parent=31 // pred_region
          %263 = vsyncadd %s255, 0
          %s264 = smul.addr %s21, 8
          %s265 = scalar_lea.hbm %s3, %s264
          %s267 = sshll.u32 %s258, 4
          %s268 = int_to_ptr.vmem [resolvable:$true] %s267
          %s269 = sshll.u32 %s265, 4
          %s270 = int_to_ptr.hbm [resolvable:$true] %s269
          %272 = dma.vmem_to_hbm [thread:$0]  %s268, 128, %s270, %s255
        $region44: #{tpu_custom_call.1} parent=31 // pred_fallthru
          _
      $region32: #{tpu_custom_call.1} parent=5 // pred_fallthru
        _
      %p273 = scmp.le.s32.totalorder 2, %s16
      // Predicated region
      $region45: #{tpu_custom_call.1} parent=5 // pred_check
        %p274 = pneg %p273
      $region46: #{tpu_custom_call.1} parent=5 // pred_check_branch
        %276 = sbr.rel (%p274) target = $region48
      $region47: #{tpu_custom_call.1} parent=5 // pred_region
        %s277 = ssub.s32 %s16, 2
        // Predicated region
        $region49: #{tpu_custom_call.1} parent=47 // pred_check
          %p278 = pneg %p113
        $region50: #{tpu_custom_call.1} parent=47 // pred_check_branch
          %280 = sbr.rel (%p278) target = $region52
        $region51: #{tpu_custom_call.1} parent=47 // pred_region
          %s281 = sand.u32 %s98, 1
          %s282 = scalar_lea.sflag [#allocation4], %s281
          %s283 = sand.u32 %s98, 1
          %s284 = smul.addr %s283, 8
          %s285 = scalar_lea.vmem [#allocation7], %s284
          %287 = dma.done %s282, 128
        $region52: #{tpu_custom_call.1} parent=47 // pred_fallthru
          _
      $region48: #{tpu_custom_call.1} parent=5 // pred_fallthru
        _
    $region6: #{tpu_custom_call.1} parent=1 // loop_footer
      %s20 = sadd.s32 1, %s16
    $region7: #{tpu_custom_call.1} parent=1 // loop_footer_branch
      %15 = sbr.rel target = $region3
    $region8: #{tpu_custom_call.1} parent=1 // loop_exit
      _
    %288 = vsyncpa [#allocation3], 1
    %s289 = scalar_lea.sflag [#allocation3], 1
    %290 = vsyncpa %s289, 1
    %291 = vsyncpa [#allocation6], 1
    %292 = vsyncpa [#allocation4], 1
    %s293 = scalar_lea.sflag [#allocation4], 1
    %294 = vsyncpa %s293, 1

</llo_original>
